<compile_context>
chip_gen: v7x
topology: tpu7x:2x2x1
jax: 0.10.0
libtpu: 0.0.40
codegen_flags: <defaults>
</compile_context>

<pallas_src>
import jax
import jax.numpy as jnp
from jax.experimental import pallas as pl
from jax.experimental.pallas import tpu as pltpu


def _ada_ln_zero_kernel(x_ref, w_ref, b_ref, o_ref):
    # x_ref: (B, D_in) resident in VMEM across all grid steps.
    # w_ref: (D_in, tn) weight slab for this (chunk, sub-tile).
    # b_ref: (1, tn), o_ref: (B, tn).
    x = x_ref[...].astype(jnp.float32)
    # SiLU in f32 (v5e has no bf16 VPU/EUP). Recomputed per N-tile: a few vregs
    # of VPU/EUP work for small B, fully hidden under the weight DMA, and safe
    # with "parallel" megacore sharding (no cross-step scratch init needed).
    h = x * jax.nn.sigmoid(x)
    h = h.astype(w_ref.dtype)  # feed the MXU in the weight dtype (bf16 path)
    y = jnp.dot(h, w_ref[...], preferred_element_type=jnp.float32)   # MXU
    y = y + b_ref[...].astype(jnp.float32)                           # (1, tn) bcast
    o_ref[...] = y.astype(o_ref.dtype)


def _pick_tn(E, max_tn=512):
    """Largest multiple of 128 that divides E (capped); else the full chunk."""
    if E % 128 != 0:
        return E  # legal (full dim); lane-masked stores, but correct
    for cand in (512, 384, 256, 128):
        if cand <= max_tn and E % cand == 0:
            return cand
    return 128


def pack_linear_params(weight_t, bias, n_chunks):
    """One-time layout prep (outside the hot path).

    weight_t: (D_in, n_chunks*E)  (i.e. PyTorch weight transposed)
    bias:     (n_chunks*E,)
    Returns   w3: (n_chunks, D_in, E), b3: (n_chunks, 1, E)
    """
    D_in, D_out = weight_t.shape
    assert D_out % n_chunks == 0
    E = D_out // n_chunks
    w3 = weight_t.reshape(D_in, n_chunks, E).transpose(1, 0, 2)
    b3 = bias.reshape(n_chunks, 1, E)
    return w3, b3


def ada_layer_norm_zero(x, w3, b3):
    """x: (B, D_in); w3: (n_chunks, D_in, E); b3: (n_chunks, 1, E).

    Returns a tuple of n_chunks arrays, each (B, E) — matching
    torch.Tensor.chunk(n_chunks, dim=1) of Linear(silu(x)).
    """
    B, D_in = x.shape
    n_chunks, D_in_w, E = w3.shape
    assert D_in_w == D_in and b3.shape == (n_chunks, 1, E)

    tn = _pick_tn(E)
    n_sub = E // tn
    out_dtype = x.dtype
    out_itemsize = jnp.dtype(out_dtype).itemsize

    # Explicit VMEM budget: double-buffered streamed blocks + resident x + slack.
    w_blk = D_in * tn * jnp.dtype(w3.dtype).itemsize
    b_blk = tn * jnp.dtype(b3.dtype).itemsize
    o_blk = B * tn * out_itemsize
    x_blk = B * D_in * jnp.dtype(x.dtype).itemsize
    vmem_limit = int(2 * (w_blk + b_blk + o_blk) + 2 * x_blk) + (4 << 20)
    vmem_limit = max(vmem_limit, 16 << 20)
    vmem_limit = min(vmem_limit, 64 << 20)  # stay inside v7x physical VMEM

    cost = pl.CostEstimate(
        flops=2 * B * D_in * n_chunks * E,
        transcendentals=B * D_in,
        bytes_accessed=int(x.nbytes) + int(w3.nbytes) + int(b3.nbytes)
        + B * n_chunks * E * out_itemsize,
    )

    out3 = pl.pallas_call(
        _ada_ln_zero_kernel,
        out_shape=jax.ShapeDtypeStruct((n_chunks, B, E), out_dtype),
        grid_spec=pltpu.PrefetchScalarGridSpec(
            num_scalar_prefetch=0,
            grid=(n_chunks, n_sub),
            in_specs=[
                # x: same block for every step -> stays VMEM-resident.
                pl.BlockSpec((B, D_in), lambda c, t: (0, 0)),
                # weight: streamed (D_in, tn) slabs, double-buffered by Pallas.
                pl.BlockSpec((None, D_in, tn), lambda c, t: (c, 0, t)),
                # bias: matching (1, tn) slab.
                pl.BlockSpec((None, 1, tn), lambda c, t: (c, 0, t)),
            ],
            # Output written directly in chunked (n_chunks, B, E) layout.
            out_specs=pl.BlockSpec((None, B, tn), lambda c, t: (c, 0, t)),
        ),
        compiler_params=pltpu.CompilerParams(
            dimension_semantics=("parallel", "parallel"),
            vmem_limit_bytes=vmem_limit,
        ),
        cost_estimate=cost,
    )(x, w3, b3)

    # chunk(dim=1): each chunk is a contiguous leading-axis slice (tiny copy).
    return tuple(out3[c] for c in range(n_chunks))


if __name__ == "__main__":
    # Small shapes consistent with the module:
    #   input_dim=256, embedding_dim=128, param_factor=6, n_context=0 -> n_chunks=6
    B = 8
    input_dim = 256
    embedding_dim = 128
    param_factor = 6
    n_context = 0
    n_chunks = (1 + n_context) * param_factor
    D_out = n_chunks * embedding_dim

    key = jax.random.PRNGKey(0)
    kx, kw, kb = jax.random.split(key, 3)
    x = jax.random.normal(kx, (B, input_dim), dtype=jnp.float32)
    # Weights stored in bf16 (halves HBM bytes for this weight-streaming op);
    # bias kept in f32 (tiny). Deterministic non-zero params (see NOTE above).
    weight_t = (0.02 * jax.random.normal(kw, (input_dim, D_out),
                                         dtype=jnp.float32)).astype(jnp.bfloat16)
    bias = 0.02 * jax.random.normal(kb, (D_out,), dtype=jnp.float32)

    w3, b3 = pack_linear_params(weight_t, bias, n_chunks)
    outs = ada_layer_norm_zero(x, w3, b3)
    outs = jax.block_until_ready(outs)

    # Reference check (plain JAX, emulating the bf16 MXU ingest path).
    h = x * jax.nn.sigmoid(x)
    ref = jnp.dot(h.astype(jnp.bfloat16).astype(jnp.float32),
                  weight_t.astype(jnp.float32),
                  preferred_element_type=jnp.float32) + bias[None, :]
    ref_chunks = jnp.split(ref, n_chunks, axis=1)
    for got, want in zip(outs, ref_chunks):
        assert got.shape == (B, embedding_dim)
        assert jnp.allclose(got, want, atol=5e-3, rtol=5e-3), \
            float(jnp.max(jnp.abs(got - want)))

    print("KERNEL_OK")
</pallas_src>

<mosaic_0001>
module attributes {stable_mosaic.version = 11 : i64} {
  func.func @_ada_ln_zero_kernel(%arg0: i32, %arg1: i32, %arg2: memref<8x256xf32, #tpu.memory_space<vmem>>, %arg3: memref<1x256x128xbf16, #tpu.memory_space<vmem>>, %arg4: memref<1x1x128xf32, #tpu.memory_space<vmem>>, %arg5: memref<1x8x128xf32, #tpu.memory_space<vmem>>) attributes {dimension_semantics = [#tpu.dimension_semantics<parallel>, #tpu.dimension_semantics<parallel>], iteration_bounds = array<i64: 6, 1>, scalar_prefetch = 0 : i64, scratch_operands = 0 : i64, tpu.core_type = #tpu.core_type<tc>, window_params = [{pipeline_mode = #tpu.pipeline_mode<synchronous>, transform_indices = @transform_0, window_bounds = array<i64: 8, 256>}, {transform_indices = @transform_1, window_bounds = array<i64: 1, 256, 128>}, {transform_indices = @transform_2, window_bounds = array<i64: 1, 1, 128>}, {transform_indices = @transform_3, window_bounds = array<i64: 1, 8, 128>}]} {
    %c0 = arith.constant 0 : index
    %c0_0 = arith.constant 0 : index
    %0 = vector.load %arg2[%c0, %c0_0] : memref<8x256xf32, #tpu.memory_space<vmem>>, vector<8x256xf32>
    %1 = arith.negf %0 : vector<8x256xf32>
    %2 = math.exp %1 : vector<8x256xf32>
    %cst = arith.constant 1.000000e+00 : f32
    %3 = vector.broadcast %cst : f32 to vector<8x256xf32>
    %4 = arith.addf %3, %2 : vector<8x256xf32>
    %5 = arith.divf %3, %4 : vector<8x256xf32>
    %6 = arith.mulf %0, %5 : vector<8x256xf32>
    %7 = arith.truncf %6 : vector<8x256xf32> to vector<8x256xbf16>
    %c0_1 = arith.constant 0 : index
    %c0_2 = arith.constant 0 : index
    %c0_3 = arith.constant 0 : index
    %8 = vector.load %arg3[%c0_1, %c0_2, %c0_3] : memref<1x256x128xbf16, #tpu.memory_space<vmem>>, vector<1x256x128xbf16>
    %9 = vector.shape_cast %8 : vector<1x256x128xbf16> to vector<256x128xbf16>
    %cst_4 = arith.constant dense<0.000000e+00> : vector<8x128xf32>
    %10 = tpu.matmul %7, %9, %cst_4 {dimension_numbers = #tpu.dot_dimension_numbers<[1], [0], [0], [1], [0, 0, 1, 1], [], []>} : vector<8x256xbf16>, vector<256x128xbf16>, vector<8x128xf32> -> vector<8x128xf32>
    %c0_5 = arith.constant 0 : index
    %c0_6 = arith.constant 0 : index
    %c0_7 = arith.constant 0 : index
    %11 = vector.load %arg4[%c0_5, %c0_6, %c0_7] : memref<1x1x128xf32, #tpu.memory_space<vmem>>, vector<1x1x128xf32>
    %12 = vector.shape_cast %11 : vector<1x1x128xf32> to vector<1x128xf32>
    %13 = vector.broadcast %12 : vector<1x128xf32> to vector<8x128xf32>
    %14 = arith.addf %10, %13 : vector<8x128xf32>
    %c0_8 = arith.constant 0 : index
    %c0_9 = arith.constant 0 : index
    %c0_10 = arith.constant 0 : index
    %15 = vector.load %arg5[%c0_8, %c0_9, %c0_10] : memref<1x8x128xf32, #tpu.memory_space<vmem>>, vector<1x8x128xf32>
    %16 = vector.shape_cast %15 : vector<1x8x128xf32> to vector<8x128xf32>
    %17 = vector.shape_cast %14 : vector<8x128xf32> to vector<1x8x128xf32>
    tpu.vector_store %arg5[%c0_8, %c0_9, %c0_10], %17 {strides = array<i32>} : memref<1x8x128xf32, #tpu.memory_space<vmem>>, vector<1x8x128xf32>,
    return
  }
  func.func @transform_0(%arg0: i32, %arg1: i32) -> (i32, i32) {
    %c0_i32 = arith.constant 0 : i32
    %c0_i32_0 = arith.constant 0 : i32
    %c0_i32_1 = arith.constant 0 : i32
    return %c0_i32, %c0_i32_0 : i32, i32
  }
  func.func @transform_1(%arg0: i32, %arg1: i32) -> (i32, i32, i32) {
    %c0_i32 = arith.constant 0 : i32
    %c0_i32_0 = arith.constant 0 : i32
    return %arg0, %c0_i32, %arg1 : i32, i32, i32
  }
  func.func @transform_2(%arg0: i32, %arg1: i32) -> (i32, i32, i32) {
    %c0_i32 = arith.constant 0 : i32
    %c0_i32_0 = arith.constant 0 : i32
    return %arg0, %c0_i32, %arg1 : i32, i32, i32
  }
  func.func @transform_3(%arg0: i32, %arg1: i32) -> (i32, i32, i32) {
    %c0_i32 = arith.constant 0 : i32
    %c0_i32_0 = arith.constant 0 : i32
    return %arg0, %c0_i32, %arg1 : i32, i32, i32
  }
}

</mosaic_0001>

<llo_original>
// kernel: tpu_custom_call.1
$region0: #{tpu_custom_call.1}
  #allocation0 [shape = 'u32[]', space=smem, size = 0x4, offset = 0x4, fixed_abs, tag = 'smem constant byte address 0x4 - core index']
  #allocation1 [shape = 'u32[144,128]{1,0:T(1,128)}', space=vmem, size = 0x12000, scoped, tag = 'internal scratch']
  %s0 = inlined_call_operand.hbm [shape: f32[8,256], index: 0, kind: input, shape index: {}]
  %s1 = inlined_call_operand.hbm [shape: bf16[6,256,128], index: 1, kind: input, shape index: {}]
  %s2 = inlined_call_operand.vmem [shape: f32[6,1,128], index: 2, kind: input, shape index: {}]
  %s3 = inlined_call_operand.hbm [shape: f32[6,8,128], index: 3, kind: output, shape index: {}]
  %s4 = sld [smem:[#allocation0]]
  $region53: #{tpu_custom_call.1} parent=0
    _
  %s6 = ssub.s32 1, %s4
  %s7 = scalar_select 0, %s6, %s4
  $region1: #{tpu_custom_call.1} parent=0
    #allocation2 [shape = 'u8[8192]{0}', space=vmem, size = 0x2000, scoped, tag = 'input window, operand 0, single buffered']
    #allocation3 [shape = 's32[2]{0}', space=sflag, size = 0x8, scoped, tag = 'scoped memory for tpu_custom_call.1']
    #allocation4 [shape = 's32[2]{0}', space=sflag, size = 0x8, scoped, tag = 'scoped memory for tpu_custom_call.1']
    #allocation5 [shape = 'u8[131072]{0}', space=vmem, size = 0x20000, scoped, tag = 'input window, operand 1']
    #allocation6 [shape = 's32[2]{0}', space=sflag, size = 0x8, scoped, tag = 'scoped memory for tpu_custom_call.1']
    #allocation7 [shape = 'u8[8192]{0}', space=vmem, size = 0x2000, scoped, tag = 'output window, operand 0']
    %8 = vsyncpa [#allocation3], 0
    %9 = vsyncpa [#allocation6], 0
    %s10 = scalar_lea.sflag [#allocation6], 1
    %11 = vsyncpa %s10, 0
    %12 = vsyncpa [#allocation4], 0
    %s13 = scalar_lea.sflag [#allocation4], 1
    %14 = vsyncpa %s13, 0
    loop: start=0, step=1, limit=8
    $region2: #{tpu_custom_call.1} parent=1 // loop_pre_header
      _
    $region3: #{tpu_custom_call.1} parent=1 // loop_header
      %s16 = sphi 0, %s20
      %p17 = scmp.ge.s32.totalorder %s16, 8
      %s23 = sphi 0, %s35
      %s24 = sphi 0, %s31
      %s25 = sphi 0, %s23
      %s26 = sphi 0, %s24
      %s27 = sphi 0, %s25
      %s28 = sphi 0, %s26
      %s36 = sphi 0, %s36
      %s38 = sphi 0, %s36
      %s39 = sphi 0, %s38
      %s53 = sphi 0, %s39
      %s61 = sphi 0, %s63
      %s64 = sphi 0, %s61
      %s65 = sphi 0, %s64
      %s81 = sphi 0, %s65
      %s89 = sphi 0, %s91
      %s92 = sphi 0, %s89
      %s93 = sphi 0, %s92
      %s109 = sphi 0, %s93
      %s117 = sphi 0, %s119
      %s120 = sphi 0, %s117
      %s121 = sphi 0, %s120
      %s137 = sphi 0, %s121
    $region4: #{tpu_custom_call.1} parent=1 // loop_header_branch
      %19 = sbr.rel (%p17) target = $region8
    $region5: #{tpu_custom_call.1} parent=1 // loop_body
      %s21 = ssub.s32 %s16, 1
      %s22 = ssub.s32 %s16, 2
      %s29 = sadd.s32 1, %s24
      %p30 = scmp.ge.s32.totalorder %s29, 1
      %s31 = scalar_select %p30, 0, %s29
      %s32 = sadd.s32 1, %s23
      %s33 = scalar_select %p30, %s32, %s23
      %p34 = scmp.ge.s32.totalorder %s33, 6
      %s35 = scalar_select %p34, 0, %s33
      %s37 = sadd.s32 %s36, 1
      %p40 = scmp.eq.s32.totalorder %s16, 5
      %p41 = scmp.ne.s32.totalorder %s36, %s38
      %p42 = scmp.eq.s32.totalorder %s16, 0
      %p43 = por %p41, %p42
      %p44 = scmp.ne.s32.totalorder %s36, %s38
      %p45 = scmp.eq.s32.totalorder %s21, 5
      %p46 = por %p44, %p45
      %p47 = scmp.ne.s32.totalorder %s38, %s39
      %p48 = scmp.eq.s32.totalorder %s21, 0
      %p49 = por %p47, %p48
      %p50 = scmp.ne.s32.totalorder %s38, %s39
      %p51 = scmp.eq.s32.totalorder %s22, 5
      %p52 = por %p50, %p51
      %p54 = scmp.ne.s32.totalorder %s39, %s53
      %p55 = scmp.eq.s32.totalorder %s22, 0
      %p56 = por %p54, %p55
      %s57 = ssub.s32 %s23, %s35
      %s58 = ssub.s32 %s24, %s31
      %s59 = sor.u32 %s57, %s58
      %p60 = scmp.eq.s32.totalorder %s59, 0
      %s62 = sadd.s32 %s61, 1
      %s63 = scalar_select %p60, %s61, %s62
      %p66 = pneg %p60
      %p67 = scmp.eq.s32.totalorder %s16, 5
      %p68 = por %p66, %p67
      %p69 = scmp.ne.s32.totalorder %s61, %s64
      %p70 = scmp.eq.s32.totalorder %s16, 0
      %p71 = por %p69, %p70
      %p72 = scmp.ne.s32.totalorder %s61, %s64
      %p73 = scmp.eq.s32.totalorder %s21, 5
      %p74 = por %p72, %p73
      %p75 = scmp.ne.s32.totalorder %s64, %s65
      %p76 = scmp.eq.s32.totalorder %s21, 0
      %p77 = por %p75, %p76
      %p78 = scmp.ne.s32.totalorder %s64, %s65
      %p79 = scmp.eq.s32.totalorder %s22, 5
      %p80 = por %p78, %p79
      %p82 = scmp.ne.s32.totalorder %s65, %s81
      %p83 = scmp.eq.s32.totalorder %s22, 0
      %p84 = por %p82, %p83
      %s85 = ssub.s32 %s23, %s35
      %s86 = ssub.s32 %s24, %s31
      %s87 = sor.u32 %s85, %s86
      %p88 = scmp.eq.s32.totalorder %s87, 0
      %s90 = sadd.s32 %s89, 1
      %s91 = scalar_select %p88, %s89, %s90
      %p94 = pneg %p88
      %p95 = scmp.eq.s32.totalorder %s16, 5
      %p96 = por %p94, %p95
      %p97 = scmp.ne.s32.totalorder %s89, %s92
      %p98 = scmp.eq.s32.totalorder %s16, 0
      %p99 = por %p97, %p98
      %p100 = scmp.ne.s32.totalorder %s89, %s92
      %p101 = scmp.eq.s32.totalorder %s21, 5
      %p102 = por %p100, %p101
      %p103 = scmp.ne.s32.totalorder %s92, %s93
      %p104 = scmp.eq.s32.totalorder %s21, 0
      %p105 = por %p103, %p104
      %p106 = scmp.ne.s32.totalorder %s92, %s93
      %p107 = scmp.eq.s32.totalorder %s22, 5
      %p108 = por %p106, %p107
      %p110 = scmp.ne.s32.totalorder %s93, %s109
      %p111 = scmp.eq.s32.totalorder %s22, 0
      %p112 = por %p110, %p111
      %s113 = ssub.s32 %s23, %s35
      %s114 = ssub.s32 %s24, %s31
      %s115 = sor.u32 %s113, %s114
      %p116 = scmp.eq.s32.totalorder %s115, 0
      %s118 = sadd.s32 %s117, 1
      %s119 = scalar_select %p116, %s117, %s118
      %p122 = pneg %p116
      %p123 = scmp.eq.s32.totalorder %s16, 5
      %p124 = por %p122, %p123
      %p125 = scmp.ne.s32.totalorder %s117, %s120
      %p126 = scmp.eq.s32.totalorder %s16, 0
      %p127 = por %p125, %p126
      %p128 = scmp.ne.s32.totalorder %s117, %s120
      %p129 = scmp.eq.s32.totalorder %s21, 5
      %p130 = por %p128, %p129
      %p131 = scmp.ne.s32.totalorder %s120, %s121
      %p132 = scmp.eq.s32.totalorder %s21, 0
      %p133 = por %p131, %p132
      %p134 = scmp.ne.s32.totalorder %s120, %s121
      %p135 = scmp.eq.s32.totalorder %s22, 5
      %p136 = por %p134, %p135
      %p138 = scmp.ne.s32.totalorder %s121, %s137
      %p139 = scmp.eq.s32.totalorder %s22, 0
      %p140 = por %p138, %p139
      %p141 = scmp.le.s32.totalorder 1, %s16
      %p142 = scmp.lt.s32.totalorder %s16, 7
      %p143 = pnand %p141, %p142
      %p144 = pneg %p143
      // Predicated region
      $region9: #{tpu_custom_call.1} parent=5 // pred_check
        _
      $region10: #{tpu_custom_call.1} parent=5 // pred_check_branch
        %146 = sbr.rel (%p143) target = $region12
      $region11: #{tpu_custom_call.1} parent=5 // pred_region
        %s147 = ssub.s32 %s16, 1
        // Predicated region
        $region13: #{tpu_custom_call.1} parent=11 // pred_check
          %p148 = pneg %p49
        $region14: #{tpu_custom_call.1} parent=11 // pred_check_branch
          %150 = sbr.rel (%p148) target = $region16
        $region15: #{tpu_custom_call.1} parent=11 // pred_region
          %s152 = ssub.s32 256, 256
          %153 = vsyncadd [#allocation3], %s152
          %s155 = sshll.u32 [#allocation2], 4
          %s156 = int_to_ptr.vmem [resolvable:$true] %s155
          %158 = dma.hbm_to_vmem [thread:$0]  %s0, 256, %s156, [#allocation3]
        $region16: #{tpu_custom_call.1} parent=11 // pred_fallthru
          _
      $region12: #{tpu_custom_call.1} parent=5 // pred_fallthru
        _
      %p159 = scmp.lt.s32.totalorder %s16, 6
      // Predicated region
      $region17: #{tpu_custom_call.1} parent=5 // pred_check
        %p160 = pneg %p159
      $region18: #{tpu_custom_call.1} parent=5 // pred_check_branch
        %162 = sbr.rel (%p160) target = $region20
      $region19: #{tpu_custom_call.1} parent=5 // pred_region
        // Predicated region
        $region21: #{tpu_custom_call.1} parent=19 // pred_check
          %p163 = pneg %p71
        $region22: #{tpu_custom_call.1} parent=19 // pred_check_branch
          %165 = sbr.rel (%p163) target = $region24
        $region23: #{tpu_custom_call.1} parent=19 // pred_region
          %s166 = sand.u32 %s61, 1
          %s167 = scalar_lea.sflag [#allocation6], %s166
          %s168 = sand.u32 %s61, 1
          %s169 = smul.addr %s168, 128
          %s170 = scalar_lea.vmem [#allocation5], %s169
          %s172 = ssub.s32 2048, 2048
          %173 = vsyncadd %s167, %s172
          %s174 = smul.addr %s23, 32
          %s175 = sadd.s32 %s24, %s174
          %s176 = smul.addr %s175, 64
          %s177 = scalar_lea.hbm %s1, %s176
          %s178 = sshll.u32 %s170, 4
          %s179 = int_to_ptr.vmem [resolvable:$true] %s178
          %184 = dma.hbm_to_vmem [thread:$0]  %s177, 2048, %s179, %s167, 64, 64, 4
        $region24: #{tpu_custom_call.1} parent=19 // pred_fallthru
          _
        // Predicated region
        $region25: #{tpu_custom_call.1} parent=19 // pred_check
          %p185 = pneg %p99
        $region26: #{tpu_custom_call.1} parent=19 // pred_check_branch
          %187 = sbr.rel (%p185) target = $region28
        $region27: #{tpu_custom_call.1} parent=19 // pred_region
          %p188 = scmp.lt.s32.totalorder %s23, 5
          %s189 = scalar_select %p188, %s23, 5
          %p190 = scmp.lt.s32.totalorder %s24, 0
          %s191 = scalar_select %p190, %s24, 0
          %s192 = sadd.s32 %s191, %s189
          %s193 = scalar_lea.vmem %s2, %s192
        $region28: #{tpu_custom_call.1} parent=19 // pred_fallthru
          _
      $region20: #{tpu_custom_call.1} parent=5 // pred_fallthru
        _
      %p194 = scmp.le.s32.totalorder 1, %s16
      %p195 = scmp.lt.s32.totalorder %s16, 7
      %p196 = pnand %p194, %p195
      %p197 = pneg %p196
      // Predicated region
      $region29: #{tpu_custom_call.1} parent=5 // pred_check
        _
      $region30: #{tpu_custom_call.1} parent=5 // pred_check_branch
        %199 = sbr.rel (%p196) target = $region32
      $region31: #{tpu_custom_call.1} parent=5 // pred_region
        %s200 = ssub.s32 %s16, 1
        // Predicated region
        $region33: #{tpu_custom_call.1} parent=31 // pred_check
          %p201 = pneg %p49
        $region34: #{tpu_custom_call.1} parent=31 // pred_check_branch
          %203 = sbr.rel (%p201) target = $region36
        $region35: #{tpu_custom_call.1} parent=31 // pred_region
          %204 = dma.done [#allocation3], 256
        $region36: #{tpu_custom_call.1} parent=31 // pred_fallthru
          _
        %s205 = sand.u32 %s64, 1
        %s206 = scalar_lea.sflag [#allocation6], %s205
        %s207 = sand.u32 %s64, 1
        %s208 = smul.addr %s207, 128
        %s209 = scalar_lea.vmem [#allocation5], %s208
        // Predicated region
        $region37: #{tpu_custom_call.1} parent=31 // pred_check
          %p210 = pneg %p77
        $region38: #{tpu_custom_call.1} parent=31 // pred_check_branch
          %212 = sbr.rel (%p210) target = $region40
        $region39: #{tpu_custom_call.1} parent=31 // pred_region
          %213 = dma.done %s206, 2048
        $region40: #{tpu_custom_call.1} parent=31 // pred_fallthru
          _
        %p214 = pneg %p49
        %p215 = pneg %p46
        %s216 = sand.u32 %s64, 1
        %s217 = scalar_lea.sflag [#allocation6], %s216
        %s218 = sand.u32 %s64, 1
        %s219 = smul.addr %s218, 128
        %s220 = scalar_lea.vmem [#allocation5], %s219
        %p221 = pneg %p77
        %p222 = pneg %p74
        %p223 = scmp.lt.s32.totalorder %s25, 5
        %s224 = scalar_select %p223, %s25, 5
        %p225 = scmp.lt.s32.totalorder %s26, 0
        %s226 = scalar_select %p225, %s26, 0
        %s227 = sadd.s32 %s226, %s224
        %s228 = scalar_lea.vmem %s2, %s227
        %p229 = pneg %p105
        %p230 = pneg %p102
        %p231 = pneg %p133
        %p232 = pneg %p130
        %s233 = sand.u32 %s120, 1
        %s234 = scalar_lea.sflag [#allocation4], %s233
        %s235 = sand.u32 %s120, 1
        %s236 = smul.addr %s235, 8
        %s237 = scalar_lea.vmem [#allocation7], %s236
        %p238 = scmp.lt.s32.totalorder %s25, 5
        %s239 = scalar_select %p238, %s25, 5
        %p240 = scmp.lt.s32.totalorder %s26, 0
        %s241 = scalar_select %p240, %s26, 0
        %s242 = sadd.s32 %s241, %s239
        %s243 = scalar_lea.vmem %s2, %s242
        %v245 = vld [vmem:[#allocation2] sm:$0xff]
        %v246 = vld [vmem:[#allocation2 + $0x8] sm:$0xff]
        %v247 = vxor.u32 %v245, 2147483648
        %v248 = vxor.u32 %v246, 2147483648
        %v249 = vmul.f32 %v247, 1.442695
        %v250 = vpow.pop %v249
        %v251 = vmul.f32 %v248, 1.442695
        %v252 = vpow.pop %v251
        %v253 = vadd.f32 %v250, 1.0
        %v254 = vadd.f32 %v252, 1.0
        %v255 = vrcp.pop %v253
        %v256 = vmul.f32 1.0, %v255
        %v257 = vrcp.pop %v254
        %v258 = vmul.f32 1.0, %v257
        %v259 = vmul.f32 %v245, %v256
        %v260 = vmul.f32 %v246, %v258
        %v261 = vpack.c.bf16 %v259, %v259
        %v262 = vpack.c.bf16 %v260, %v260
        %v263 = vld [vmem:[%s209] sm:$0xf]
        %v264 = vld [vmem:[%s209 + $0x4] sm:$0xf]
        %v265 = vld [vmem:[%s209 + $0x8] sm:$0xf]
        %v266 = vld [vmem:[%s209 + $0xc] sm:$0xf]
        %v267 = vld [vmem:[%s209 + $0x10] sm:$0xf]
        %v268 = vld [vmem:[%s209 + $0x14] sm:$0xf]
        %v269 = vld [vmem:[%s209 + $0x18] sm:$0xf]
        %v270 = vld [vmem:[%s209 + $0x1c] sm:$0xf]
        %v271 = vld [vmem:[%s209 + $0x20] sm:$0xf]
        %v272 = vld [vmem:[%s209 + $0x24] sm:$0xf]
        %v273 = vld [vmem:[%s209 + $0x28] sm:$0xf]
        %v274 = vld [vmem:[%s209 + $0x2c] sm:$0xf]
        %v275 = vld [vmem:[%s209 + $0x30] sm:$0xf]
        %v276 = vld [vmem:[%s209 + $0x34] sm:$0xf]
        %v277 = vld [vmem:[%s209 + $0x38] sm:$0xf]
        %v278 = vld [vmem:[%s209 + $0x3c] sm:$0xf]
        %v279 = vld [vmem:[%s209 + $0x40] sm:$0xf]
        %v280 = vld [vmem:[%s209 + $0x44] sm:$0xf]
        %v281 = vld [vmem:[%s209 + $0x48] sm:$0xf]
        %v282 = vld [vmem:[%s209 + $0x4c] sm:$0xf]
        %v283 = vld [vmem:[%s209 + $0x50] sm:$0xf]
        %v284 = vld [vmem:[%s209 + $0x54] sm:$0xf]
        %v285 = vld [vmem:[%s209 + $0x58] sm:$0xf]
        %v286 = vld [vmem:[%s209 + $0x5c] sm:$0xf]
        %v287 = vld [vmem:[%s209 + $0x60] sm:$0xf]
        %v288 = vld [vmem:[%s209 + $0x64] sm:$0xf]
        %v289 = vld [vmem:[%s209 + $0x68] sm:$0xf]
        %v290 = vld [vmem:[%s209 + $0x6c] sm:$0xf]
        %v291 = vld [vmem:[%s209 + $0x70] sm:$0xf]
        %v292 = vld [vmem:[%s209 + $0x74] sm:$0xf]
        %v293 = vld [vmem:[%s209 + $0x78] sm:$0xf]
        %v294 = vld [vmem:[%s209 + $0x7c] sm:$0xf]
        %v295 = vld [vmem:[%s243] sm:$0x1]
        %v297 = vlaneseq
        %v298 = vshrl.u32 %v297, 7
        %v299 = vsub.s32 0, %v298
        %v300 = vrot.slane %v295, %v299
        %v334 = vunpack.c.l.b16 %v263
        %v335 = vunpack.c.l.b16 %v264
        %v336 = vunpack.c.l.b16 %v265
        %v337 = vunpack.c.l.b16 %v266
        %v338 = vunpack.c.l.b16 %v267
        %v339 = vunpack.c.l.b16 %v268
        %v340 = vunpack.c.l.b16 %v269
        %v341 = vunpack.c.l.b16 %v270
        %v342 = vunpack.c.l.b16 %v271
        %v343 = vunpack.c.l.b16 %v272
        %v344 = vunpack.c.l.b16 %v273
        %v345 = vunpack.c.l.b16 %v274
        %v346 = vunpack.c.l.b16 %v275
        %v347 = vunpack.c.l.b16 %v276
        %v348 = vunpack.c.l.b16 %v277
        %v349 = vunpack.c.l.b16 %v278
        %v350 = vunpack.c.l.b16 %v279
        %v351 = vunpack.c.l.b16 %v280
        %v352 = vunpack.c.l.b16 %v281
        %v353 = vunpack.c.l.b16 %v282
        %v354 = vunpack.c.l.b16 %v283
        %v355 = vunpack.c.l.b16 %v284
        %v356 = vunpack.c.l.b16 %v285
        %v357 = vunpack.c.l.b16 %v286
        %v358 = vunpack.c.l.b16 %v287
        %v359 = vunpack.c.l.b16 %v288
        %v360 = vunpack.c.l.b16 %v289
        %v361 = vunpack.c.l.b16 %v290
        %v362 = vunpack.c.l.b16 %v291
        %v363 = vunpack.c.l.b16 %v292
        %v364 = vunpack.c.l.b16 %v293
        %v365 = vunpack.c.l.b16 %v294
        %v366 = vpack.c.b16 %v335, %v334
        %v367 = vpack.c.b16 %v337, %v336
        %v368 = vpack.c.b16 %v339, %v338
        %v369 = vpack.c.b16 %v341, %v340
        %v370 = vpack.c.b16 %v343, %v342
        %v371 = vpack.c.b16 %v345, %v344
        %v372 = vpack.c.b16 %v347, %v346
        %v373 = vpack.c.b16 %v349, %v348
        %v374 = vpack.c.b16 %v351, %v350
        %v375 = vpack.c.b16 %v353, %v352
        %v376 = vpack.c.b16 %v355, %v354
        %v377 = vpack.c.b16 %v357, %v356
        %v378 = vpack.c.b16 %v359, %v358
        %v379 = vpack.c.b16 %v361, %v360
        %v380 = vpack.c.b16 %v363, %v362
        %v381 = vpack.c.b16 %v365, %v364
        %398 = vmatprep.subr.bf16.mxu0 0
        %399 = vmatpush1.bf16.msra.mxu0 %v366
        %400 = vmatprep.subr.bf16.mxu0 0
        %401 = vmatpush1.bf16.msra.mxu0 %v367
        %402 = vmatprep.subr.bf16.mxu0 0
        %403 = vmatpush1.bf16.msra.mxu0 %v368
        %404 = vmatprep.subr.bf16.mxu0 0
        %405 = vmatpush1.bf16.msra.mxu0 %v369
        %406 = vmatprep.subr.bf16.mxu0 0
        %407 = vmatpush1.bf16.msra.mxu0 %v370
        %408 = vmatprep.subr.bf16.mxu0 0
        %409 = vmatpush1.bf16.msra.mxu0 %v371
        %410 = vmatprep.subr.bf16.mxu0 0
        %411 = vmatpush1.bf16.msra.mxu0 %v372
        %412 = vmatprep.subr.bf16.mxu0 0
        %413 = vmatpush1.bf16.msra.mxu0 %v373
        %414 = vmatprep.subr.bf16.mxu0 0
        %415 = vmatpush1.bf16.msra.mxu0 %v374
        %416 = vmatprep.subr.bf16.mxu0 0
        %417 = vmatpush1.bf16.msra.mxu0 %v375
        %418 = vmatprep.subr.bf16.mxu0 0
        %419 = vmatpush1.bf16.msra.mxu0 %v376
        %420 = vmatprep.subr.bf16.mxu0 0
        %421 = vmatpush1.bf16.msra.mxu0 %v377
        %422 = vmatprep.subr.bf16.mxu0 0
        %423 = vmatpush1.bf16.msra.mxu0 %v378
        %424 = vmatprep.subr.bf16.mxu0 0
        %425 = vmatpush1.bf16.msra.mxu0 %v379
        %426 = vmatprep.subr.bf16.mxu0 0
        %427 = vmatpush1.bf16.msra.mxu0 %v380
        %428 = vmatprep.subr.bf16.mxu0 0
        %429 = vmatpush1.bf16.msra.mxu0 %v381
        %430 = vmatprep.mubr.bf16.mxu0 %v262
        %431 = vmatmul.mubr.bf16.gmra.mrb[0].mxu0 %v261
        %v432 = vpop.f32.mrb[0].mxu0
        %v433 = vadd.f32 %v300, %v432
        %v434 = vpop.f32.mrb[0].mxu0
        %v435 = vpop.f32.mrb[0].mxu0
        %v436 = vpop.f32.mrb[0].mxu0
        %437 = vdwg.mxu0
        %438 = vst [vmem:[%s237] sm:$0xff] %v433
        %s439 = sand.u32 %s120, 1
        %s440 = scalar_lea.sflag [#allocation4], %s439
        %s441 = sand.u32 %s120, 1
        %s442 = smul.addr %s441, 8
        %s443 = scalar_lea.vmem [#allocation7], %s442
        // Predicated region
        $region41: #{tpu_custom_call.1} parent=31 // pred_check
          %p444 = pneg %p130
        $region42: #{tpu_custom_call.1} parent=31 // pred_check_branch
          %446 = sbr.rel (%p444) target = $region44
        $region43: #{tpu_custom_call.1} parent=31 // pred_region
          %s448 = ssub.s32 128, 128
          %449 = vsyncadd %s440, %s448
          %s450 = sadd.s32 %s26, %s25
          %s451 = smul.addr %s450, 128
          %s452 = scalar_lea.hbm %s3, %s451
          %s454 = sshll.u32 %s443, 4
          %s455 = int_to_ptr.vmem [resolvable:$true] %s454
          %457 = dma.vmem_to_hbm [thread:$0]  %s455, 128, %s452, %s440
        $region44: #{tpu_custom_call.1} parent=31 // pred_fallthru
          _
      $region32: #{tpu_custom_call.1} parent=5 // pred_fallthru
        _
      %p458 = scmp.le.s32.totalorder 2, %s16
      // Predicated region
      $region45: #{tpu_custom_call.1} parent=5 // pred_check
        %p459 = pneg %p458
      $region46: #{tpu_custom_call.1} parent=5 // pred_check_branch
        %461 = sbr.rel (%p459) target = $region48
      $region47: #{tpu_custom_call.1} parent=5 // pred_region
        %s462 = ssub.s32 %s16, 2
        // Predicated region
        $region49: #{tpu_custom_call.1} parent=47 // pred_check
          %p463 = pneg %p136
        $region50: #{tpu_custom_call.1} parent=47 // pred_check_branch
          %465 = sbr.rel (%p463) target = $region52
        $region51: #{tpu_custom_call.1} parent=47 // pred_region
          %s466 = sand.u32 %s121, 1
          %s467 = scalar_lea.sflag [#allocation4], %s466
          %s468 = sand.u32 %s121, 1
          %s469 = smul.addr %s468, 8
          %s470 = scalar_lea.vmem [#allocation7], %s469
          %471 = dma.done %s467, 128
        $region52: #{tpu_custom_call.1} parent=47 // pred_fallthru
          _
      $region48: #{tpu_custom_call.1} parent=5 // pred_fallthru
        _
    $region6: #{tpu_custom_call.1} parent=1 // loop_footer
      %s20 = sadd.s32 1, %s16
    $region7: #{tpu_custom_call.1} parent=1 // loop_footer_branch
      %15 = sbr.rel target = $region3
    $region8: #{tpu_custom_call.1} parent=1 // loop_exit
      _
    %472 = vsyncpa [#allocation3], 1
    %s473 = scalar_lea.sflag [#allocation3], 1
    %474 = vsyncpa %s473, 1
    %475 = vsyncpa [#allocation6], 1
    %s476 = scalar_lea.sflag [#allocation6], 1
    %477 = vsyncpa %s476, 1
    %478 = vsyncpa [#allocation4], 1
    %s479 = scalar_lea.sflag [#allocation4], 1
    %480 = vsyncpa %s479, 1

</llo_original>
